<compile_context>
chip_gen: v7x
topology: tpu7x:2x2x1
jax: 0.10.0
libtpu: 0.0.40
codegen_flags: <defaults>
</compile_context>

<pallas_src>
import jax
import jax.numpy as jnp
from jax.experimental import pallas as pl
from jax.experimental.pallas import tpu as pltpu


def _round_up(n, m):
    return ((n + m - 1) // m) * m


def _cdiv(a, b):
    return (a + b - 1) // b


def _mlp_kernel(x_ref, w1_ref, b1_ref, w2_ref, b2_ref, o_ref):
    # Feature-major (batch-on-lanes) layout:
    #   x_ref  : [F_in, bt]   activation tile (batch on the 128-lane axis)
    #   w1_ref : [H, F_in]    torch fc1.weight layout [out, in]
    #   b1_ref : [H, 1]
    #   w2_ref : [F_out, H]   torch fc2.weight layout [out, in]
    #   b2_ref : [F_out, 1]
    #   o_ref  : [F_out, bt]
    h = jnp.dot(w1_ref[...], x_ref[...], preferred_element_type=jnp.float32)
    h = jnp.maximum(h + b1_ref[...], 0.0)               # bias broadcasts over lanes
    y = jnp.dot(w2_ref[...], h, preferred_element_type=jnp.float32)
    o_ref[...] = y + b2_ref[...]


def mlp_forward(x, w1, b1, w2, b2, *, batch_tile=2048):
    """Pallas forward pass for the 2-layer MLP (fc1 -> ReLU -> fc2).

    x  : [B, F_in]             float32
    w1 : [H, F_in]             float32   (torch fc1.weight layout)
    b1 : [H] or [H, 1]         float32
    w2 : [F_out, H]            float32   (torch fc2.weight layout)
    b2 : [F_out] or [F_out,1]  float32
    returns [B, F_out]         float32
    """
    B, F_in = x.shape
    H, F_in_w = w1.shape
    F_out, H_w = w2.shape
    assert F_in_w == F_in and H_w == H

    b1c = jnp.reshape(b1, (H, 1))
    b2c = jnp.reshape(b2, (F_out, 1))

    LANES = 128
    # Number of batch tiles derived from B (balanced tiles, no fixed pad).
    # Once B is big enough, force >= 2 tiles so the "parallel" batch axis can
    # shard across v7x's two TensorCores; below that, overhead dominates.
    n_tiles = _cdiv(B, batch_tile)
    if B >= 2 * LANES:
        n_tiles = max(n_tiles, 2)
    # Batch rides the lane axis -> tile must be a multiple of 128.
    bt = _round_up(_cdiv(B, n_tiles), LANES)
    B_p = n_tiles * bt

    # Feature-major activations: [F_in, B_p].  Only the batch axis is
    # zero-padded (padded columns are sliced off below).  Feature dims are
    # left at their natural sizes: block dims equal to the full array dims
    # satisfy the (8,128) tiling rule, so no wrapper-side weight padding.
    xT = jnp.pad(jnp.transpose(x), ((0, 0), (0, B_p - B)))

    outT = pl.pallas_call(
        _mlp_kernel,
        out_shape=jax.ShapeDtypeStruct((F_out, B_p), jnp.float32),
        grid=(n_tiles,),
        in_specs=[
            # activations stream over the batch grid axis (lane-dense loads)
            pl.BlockSpec((F_in, bt), lambda i: (0, i)),
            # weights / biases: constant index_map -> resident across steps
            pl.BlockSpec((H, F_in), lambda i: (0, 0)),
            pl.BlockSpec((H, 1), lambda i: (0, 0)),
            pl.BlockSpec((F_out, H), lambda i: (0, 0)),
            pl.BlockSpec((F_out, 1), lambda i: (0, 0)),
        ],
        # Narrow, lane-dense output slab: F_out sublanes x bt lanes.
        out_specs=pl.BlockSpec((F_out, bt), lambda i: (0, i)),
        compiler_params=pltpu.CompilerParams(
            dimension_semantics=("parallel",)),
    )(xT, w1, b1c, w2, b2c)

    # Back to the torch layout [B, F_out]; the slab is only F_out*B_p*4 bytes.
    return jnp.transpose(outT[:, :B])


def init_params(key, input_feature, hidden_feature, output_feature):
    """Deterministic init mimicking nn.Linear's U(-1/sqrt(fan_in), 1/sqrt(fan_in)).

    Weights are produced in the native torch [out, in] layout; biases as
    column vectors [out, 1] for the feature-major kernel layout.
    """
    k1, k2, k3, k4 = jax.random.split(key, 4)
    bound1 = 1.0 / jnp.sqrt(jnp.float32(input_feature))
    bound2 = 1.0 / jnp.sqrt(jnp.float32(hidden_feature))
    w1 = jax.random.uniform(k1, (hidden_feature, input_feature),
                            jnp.float32, -bound1, bound1)
    b1 = jax.random.uniform(k2, (hidden_feature, 1),
                            jnp.float32, -bound1, bound1)
    w2 = jax.random.uniform(k3, (output_feature, hidden_feature),
                            jnp.float32, -bound2, bound2)
    b2 = jax.random.uniform(k4, (output_feature, 1),
                            jnp.float32, -bound2, bound2)
    return w1, b1, w2, b2


def reference_forward(x, w1, b1, w2, b2):
    h = jnp.maximum(x @ w1.T + b1.reshape(1, -1), 0.0)
    return h @ w2.T + b2.reshape(1, -1)


if __name__ == "__main__":
    # TODO(synk): the torch module also bundles an Adam optimizer and is used
    # with Categorical sampling; only the forward pass is implemented here.
    # CartPole-v1: 4 observations -> hidden -> 2 actions (logits / values).
    input_feature, hidden_feature, output_feature = 4, 32, 2

    key = jax.random.PRNGKey(0)
    kx, kx2, kp = jax.random.split(key, 3)
    w1, b1, w2, b2 = init_params(kp, input_feature, hidden_feature, output_feature)

    fwd = jax.jit(mlp_forward)

    # Small smoke test at the module's natural shapes (single grid step).
    batch = 2
    x = jax.random.normal(kx, (batch, input_feature), jnp.float32)
    out = jax.block_until_ready(fwd(x, w1, b1, w2, b2))
    ref = reference_forward(x, w1, b1, w2, b2)
    assert out.shape == (batch, output_feature)
    assert jnp.allclose(out, ref, atol=1e-5, rtol=1e-5)

    # Batched rollout-style call: exercises the multi-tile batch grid
    # (B=600 -> two balanced 384-lane tiles, batch axis parallel for v7x).
    big_batch = 600
    xb = jax.random.normal(kx2, (big_batch, input_feature), jnp.float32)
    outb = jax.block_until_ready(fwd(xb, w1, b1, w2, b2))
    refb = reference_forward(xb, w1, b1, w2, b2)
    assert outb.shape == (big_batch, output_feature)
    assert jnp.allclose(outb, refb, atol=1e-5, rtol=1e-5)

    print("KERNEL_OK")
</pallas_src>

<mosaic_0001>
module attributes {stable_mosaic.version = 11 : i64} {
  func.func @_mlp_kernel(%arg0: i32, %arg1: memref<4x128xf32, #tpu.memory_space<vmem>>, %arg2: memref<32x4xf32, #tpu.memory_space<vmem>>, %arg3: memref<32x1xf32, #tpu.memory_space<vmem>>, %arg4: memref<2x32xf32, #tpu.memory_space<vmem>>, %arg5: memref<2x1xf32, #tpu.memory_space<vmem>>, %arg6: memref<2x128xf32, #tpu.memory_space<vmem>>) attributes {dimension_semantics = [#tpu.dimension_semantics<parallel>], iteration_bounds = array<i64: 1>, scalar_prefetch = 0 : i64, scratch_operands = 0 : i64, tpu.core_type = #tpu.core_type<tc>, window_params = [{transform_indices = @transform_0, window_bounds = array<i64: 4, 128>}, {pipeline_mode = #tpu.pipeline_mode<synchronous>, transform_indices = @transform_1, window_bounds = array<i64: 32, 4>}, {pipeline_mode = #tpu.pipeline_mode<synchronous>, transform_indices = @transform_2, window_bounds = array<i64: 32, 1>}, {pipeline_mode = #tpu.pipeline_mode<synchronous>, transform_indices = @transform_3, window_bounds = array<i64: 2, 32>}, {pipeline_mode = #tpu.pipeline_mode<synchronous>, transform_indices = @transform_4, window_bounds = array<i64: 2, 1>}, {transform_indices = @transform_5, window_bounds = array<i64: 2, 128>}]} {
    %c0 = arith.constant 0 : index
    %c0_0 = arith.constant 0 : index
    %0 = vector.load %arg2[%c0, %c0_0] : memref<32x4xf32, #tpu.memory_space<vmem>>, vector<32x4xf32>
    %c0_1 = arith.constant 0 : index
    %c0_2 = arith.constant 0 : index
    %1 = vector.load %arg1[%c0_1, %c0_2] : memref<4x128xf32, #tpu.memory_space<vmem>>, vector<4x128xf32>
    %cst = arith.constant dense<0.000000e+00> : vector<32x128xf32>
    %2 = tpu.matmul %0, %1, %cst {dimension_numbers = #tpu.dot_dimension_numbers<[1], [0], [0], [1], [0, 0, 1, 1], [], []>} : vector<32x4xf32>, vector<4x128xf32>, vector<32x128xf32> -> vector<32x128xf32>
    %c0_3 = arith.constant 0 : index
    %c0_4 = arith.constant 0 : index
    %3 = vector.load %arg3[%c0_3, %c0_4] : memref<32x1xf32, #tpu.memory_space<vmem>>, vector<32x1xf32>
    %4 = vector.broadcast %3 : vector<32x1xf32> to vector<32x128xf32>
    %5 = arith.addf %2, %4 : vector<32x128xf32>
    %cst_5 = arith.constant 0.000000e+00 : f32
    %6 = vector.broadcast %cst_5 : f32 to vector<32x128xf32>
    %7 = arith.maximumf %5, %6 : vector<32x128xf32>
    %c0_6 = arith.constant 0 : index
    %c0_7 = arith.constant 0 : index
    %8 = vector.load %arg4[%c0_6, %c0_7] : memref<2x32xf32, #tpu.memory_space<vmem>>, vector<2x32xf32>
    %cst_8 = arith.constant dense<0.000000e+00> : vector<2x128xf32>
    %9 = tpu.matmul %8, %7, %cst_8 {dimension_numbers = #tpu.dot_dimension_numbers<[1], [0], [0], [1], [0, 0, 1, 1], [], []>} : vector<2x32xf32>, vector<32x128xf32>, vector<2x128xf32> -> vector<2x128xf32>
    %c0_9 = arith.constant 0 : index
    %c0_10 = arith.constant 0 : index
    %10 = vector.load %arg5[%c0_9, %c0_10] : memref<2x1xf32, #tpu.memory_space<vmem>>, vector<2x1xf32>
    %11 = vector.broadcast %10 : vector<2x1xf32> to vector<2x128xf32>
    %12 = arith.addf %9, %11 : vector<2x128xf32>
    %c0_11 = arith.constant 0 : index
    %c0_12 = arith.constant 0 : index
    %13 = vector.load %arg6[%c0_11, %c0_12] : memref<2x128xf32, #tpu.memory_space<vmem>>, vector<2x128xf32>
    tpu.vector_store %arg6[%c0_11, %c0_12], %12 {strides = array<i32>} : memref<2x128xf32, #tpu.memory_space<vmem>>, vector<2x128xf32>,
    return
  }
  func.func @transform_0(%arg0: i32) -> (i32, i32) {
    %c0_i32 = arith.constant 0 : i32
    %c0_i32_0 = arith.constant 0 : i32
    return %c0_i32, %arg0 : i32, i32
  }
  func.func @transform_1(%arg0: i32) -> (i32, i32) {
    %c0_i32 = arith.constant 0 : i32
    %c0_i32_0 = arith.constant 0 : i32
    %c0_i32_1 = arith.constant 0 : i32
    return %c0_i32, %c0_i32_0 : i32, i32
  }
  func.func @transform_2(%arg0: i32) -> (i32, i32) {
    %c0_i32 = arith.constant 0 : i32
    %c0_i32_0 = arith.constant 0 : i32
    %c0_i32_1 = arith.constant 0 : i32
    return %c0_i32, %c0_i32_0 : i32, i32
  }
  func.func @transform_3(%arg0: i32) -> (i32, i32) {
    %c0_i32 = arith.constant 0 : i32
    %c0_i32_0 = arith.constant 0 : i32
    %c0_i32_1 = arith.constant 0 : i32
    return %c0_i32, %c0_i32_0 : i32, i32
  }
  func.func @transform_4(%arg0: i32) -> (i32, i32) {
    %c0_i32 = arith.constant 0 : i32
    %c0_i32_0 = arith.constant 0 : i32
    %c0_i32_1 = arith.constant 0 : i32
    return %c0_i32, %c0_i32_0 : i32, i32
  }
  func.func @transform_5(%arg0: i32) -> (i32, i32) {
    %c0_i32 = arith.constant 0 : i32
    %c0_i32_0 = arith.constant 0 : i32
    return %c0_i32, %arg0 : i32, i32
  }
}

</mosaic_0001>

<llo_original>
// kernel: mlp_forward.1
$region0: #{mlp_forward.1}
  #allocation0 [shape = 'u32[]', space=smem, size = 0x4, offset = 0x4, fixed_abs, tag = 'smem constant byte address 0x4 - core index']
  #allocation1 [shape = 'u32[144,128]{1,0:T(1,128)}', space=vmem, size = 0x12000, scoped, tag = 'internal scratch']
  %s0 = inlined_call_operand.vmem [shape: f32[4,128], index: 0, kind: input, shape index: {}]
  %s1 = inlined_call_operand.vmem [shape: f32[32,4], index: 1, kind: input, shape index: {}]
  %s2 = inlined_call_operand.vmem [shape: f32[32,1], index: 2, kind: input, shape index: {}]
  %s3 = inlined_call_operand.vmem [shape: f32[2,32], index: 3, kind: input, shape index: {}]
  %s4 = inlined_call_operand.vmem [shape: f32[2,1], index: 4, kind: input, shape index: {}]
  %s5 = inlined_call_operand.vmem [shape: f32[2,128], index: 5, kind: output, shape index: {}]
  %s6 = sld [smem:[#allocation0]]
  $region30: #{mlp_forward.1} parent=0
    _
  %s8 = ssub.s32 1, %s6
  %s9 = scalar_select 0, %s8, %s6
  // Predicated region
  $region2: #{mlp_forward.1} parent=0 // pred_check
    _
  $region3: #{mlp_forward.1} parent=0 // pred_check_branch
    %11 = sbr.rel (0) target = $region5
  $region4: #{mlp_forward.1} parent=0 // pred_region
    _
  $region5: #{mlp_forward.1} parent=0 // pred_fallthru
    _
  // Predicated region
  $region6: #{mlp_forward.1} parent=0 // pred_check
    _
  $region7: #{mlp_forward.1} parent=0 // pred_check_branch
    %13 = sbr.rel (0) target = $region9
  $region8: #{mlp_forward.1} parent=0 // pred_region
    _
  $region9: #{mlp_forward.1} parent=0 // pred_fallthru
    _
  // Predicated region
  $region10: #{mlp_forward.1} parent=0 // pred_check
    _
  $region11: #{mlp_forward.1} parent=0 // pred_check_branch
    %15 = sbr.rel (0) target = $region13
  $region12: #{mlp_forward.1} parent=0 // pred_region
    _
  $region13: #{mlp_forward.1} parent=0 // pred_fallthru
    _
  // Predicated region
  $region14: #{mlp_forward.1} parent=0 // pred_check
    _
  $region15: #{mlp_forward.1} parent=0 // pred_check_branch
    %17 = sbr.rel (0) target = $region17
  $region16: #{mlp_forward.1} parent=0 // pred_region
    _
  $region17: #{mlp_forward.1} parent=0 // pred_fallthru
    _
  // Predicated region
  $region18: #{mlp_forward.1} parent=0 // pred_check
    _
  $region19: #{mlp_forward.1} parent=0 // pred_check_branch
    %19 = sbr.rel (0) target = $region21
  $region20: #{mlp_forward.1} parent=0 // pred_region
    _
  $region21: #{mlp_forward.1} parent=0 // pred_fallthru
    _
  %v20 = vld [vmem:[%s1] sm:$0xff]
  %v21 = vld [vmem:[%s1 + $0x8] sm:$0xff]
  %v22 = vld [vmem:[%s1 + $0x10] sm:$0xff]
  %v23 = vld [vmem:[%s1 + $0x18] sm:$0xff]
  %v24 = vld [vmem:[%s0] sm:$0xf]
  %v25 = vld [vmem:[%s2] sm:$0xff]
  %v26 = vld [vmem:[%s2 + $0x8] sm:$0xff]
  %v27 = vld [vmem:[%s2 + $0x10] sm:$0xff]
  %v28 = vld [vmem:[%s2 + $0x18] sm:$0xff]
  %30 = vset.pattern.permute.xlu0 0
  %31 = vperm.xlu0 %30, %v25
  %v32 = vpop.permute.xlu0 %31
  %35 = vset.pattern.permute.xlu0 0
  %36 = vperm.xlu0 %35, %v26
  %v37 = vpop.permute.xlu0 %36
  %40 = vset.pattern.permute.xlu0 0
  %41 = vperm.xlu0 %40, %v27
  %v42 = vpop.permute.xlu0 %41
  %45 = vset.pattern.permute.xlu0 0
  %46 = vperm.xlu0 %45, %v28
  %v47 = vpop.permute.xlu0 %46
  %vm49 = vcmask 31744
  %v51 = vsel %vm49, %v20, 0
  %v54 = vsel %vm49, %v21, 0
  %v57 = vsel %vm49, %v22, 0
  %v60 = vsel %vm49, %v23, 0
  %vm62 = vcmask 1043456
  %v64 = vsel %vm62, %v24, 0
  %66 = vmatprep.subr.mxu0 0.0
  %67 = vmatpush1.msra.mxu0 %v64
  %68 = vmatprep.subr.mxu0 0.0
  %69 = vmatpush1.msra.mxu0 0.0
  %70 = vmatprep.subr.mxu0 0.0
  %71 = vmatpush1.msra.mxu0 0.0
  %72 = vmatprep.subr.mxu0 0.0
  %73 = vmatpush1.msra.mxu0 0.0
  %74 = vmatprep.subr.mxu0 0.0
  %75 = vmatpush1.msra.mxu0 0.0
  %76 = vmatprep.subr.mxu0 0.0
  %77 = vmatpush1.msra.mxu0 0.0
  %78 = vmatprep.subr.mxu0 0.0
  %79 = vmatpush1.msra.mxu0 0.0
  %80 = vmatprep.subr.mxu0 0.0
  %81 = vmatpush1.msra.mxu0 0.0
  %82 = vmatprep.subr.mxu0 0.0
  %83 = vmatpush1.msra.mxu0 0.0
  %84 = vmatprep.subr.mxu0 0.0
  %85 = vmatpush1.msra.mxu0 0.0
  %86 = vmatprep.subr.mxu0 0.0
  %87 = vmatpush1.msra.mxu0 0.0
  %88 = vmatprep.subr.mxu0 0.0
  %89 = vmatpush1.msra.mxu0 0.0
  %90 = vmatprep.subr.mxu0 0.0
  %91 = vmatpush1.msra.mxu0 0.0
  %92 = vmatprep.subr.mxu0 0.0
  %93 = vmatpush1.msra.mxu0 0.0
  %94 = vmatprep.subr.mxu0 0.0
  %95 = vmatpush1.msra.mxu0 0.0
  %96 = vmatprep.subr.mxu0 0.0
  %97 = vmatpush1.msra.mxu0 0.0
  %98 = vmatprep.subr.mxu0 0.0
  %99 = vmatpush1.msra.mxu0 0.0
  %100 = vmatprep.subr.mxu0 0.0
  %101 = vmatpush1.msra.mxu0 0.0
  %102 = vmatprep.subr.mxu0 0.0
  %103 = vmatpush1.msra.mxu0 0.0
  %104 = vmatprep.subr.mxu0 0.0
  %105 = vmatpush1.msra.mxu0 0.0
  %106 = vmatprep.subr.mxu0 0.0
  %107 = vmatpush1.msra.mxu0 0.0
  %108 = vmatprep.subr.mxu0 0.0
  %109 = vmatpush1.msra.mxu0 0.0
  %110 = vmatprep.subr.mxu0 0.0
  %111 = vmatpush1.msra.mxu0 0.0
  %112 = vmatprep.subr.mxu0 0.0
  %113 = vmatpush1.msra.mxu0 0.0
  %114 = vmatprep.subr.mxu0 0.0
  %115 = vmatpush1.msra.mxu0 0.0
  %116 = vmatprep.subr.mxu0 0.0
  %117 = vmatpush1.msra.mxu0 0.0
  %118 = vmatprep.subr.mxu0 0.0
  %119 = vmatpush1.msra.mxu0 0.0
  %120 = vmatprep.subr.mxu0 0.0
  %121 = vmatpush1.msra.mxu0 0.0
  %122 = vmatprep.subr.mxu0 0.0
  %123 = vmatpush1.msra.mxu0 0.0
  %124 = vmatprep.subr.mxu0 0.0
  %125 = vmatpush1.msra.mxu0 0.0
  %126 = vmatprep.subr.mxu0 0.0
  %127 = vmatpush1.msra.mxu0 0.0
  %128 = vmatprep.subr.mxu0 0.0
  %129 = vmatpush1.msra.mxu0 0.0
  %130 = vmatprep.mubr.f32.mxu0 0.0
  %131 = vmatmul.mubr.f32.gmra.mrb[0].mxu0 %v51
  %v132 = vpop.f32.mrb[0].mxu0
  %v133 = vadd.f32 %v32, %v132
  %v134 = vpop.f32.mrb[0].mxu0
  %135 = vmatprep.mubr.f32.mxu0 0.0
  %136 = vmatmul.mubr.f32.gmra.mrb[0].mxu0 %v54
  %v137 = vpop.f32.mrb[0].mxu0
  %v138 = vadd.f32 %v37, %v137
  %v139 = vpop.f32.mrb[0].mxu0
  %140 = vmatprep.mubr.f32.mxu0 0.0
  %141 = vmatmul.mubr.f32.gmra.mrb[0].mxu0 %v57
  %v142 = vpop.f32.mrb[0].mxu0
  %v143 = vadd.f32 %v42, %v142
  %v144 = vpop.f32.mrb[0].mxu0
  %145 = vmatprep.mubr.f32.mxu0 0.0
  %146 = vmatmul.mubr.f32.gmra.mrb[0].mxu0 %v60
  %v147 = vpop.f32.mrb[0].mxu0
  %v148 = vadd.f32 %v47, %v147
  %v149 = vpop.f32.mrb[0].mxu0
  %150 = vdwg.mxu0
  %v151 = vmax.f32 %v133, 0.0
  %v152 = vmax.f32 %v138, 0.0
  %v153 = vmax.f32 %v143, 0.0
  %v154 = vmax.f32 %v148, 0.0
  %v155 = vld [vmem:[%s3] sm:$0x3]
  %v156 = vld [vmem:[%s4] sm:$0x3]
  %158 = vset.pattern.permute.xlu0 0
  %159 = vperm.xlu0 %158, %v156
  %v160 = vpop.permute.xlu0 %159
  %vm162 = vcmask 261120
  %v164 = vsel %vm162, %v155, 0
  %166 = vmatprep.subr.mxu0 0.0
  %167 = vmatpush1.msra.mxu0 %v151
  %168 = vmatprep.subr.mxu0 0.0
  %169 = vmatpush1.msra.mxu0 %v152
  %170 = vmatprep.subr.mxu0 0.0
  %171 = vmatpush1.msra.mxu0 %v153
  %172 = vmatprep.subr.mxu0 0.0
  %173 = vmatpush1.msra.mxu0 %v154
  %174 = vmatprep.subr.mxu0 0.0
  %175 = vmatpush1.msra.mxu0 0.0
  %176 = vmatprep.subr.mxu0 0.0
  %177 = vmatpush1.msra.mxu0 0.0
  %178 = vmatprep.subr.mxu0 0.0
  %179 = vmatpush1.msra.mxu0 0.0
  %180 = vmatprep.subr.mxu0 0.0
  %181 = vmatpush1.msra.mxu0 0.0
  %182 = vmatprep.subr.mxu0 0.0
  %183 = vmatpush1.msra.mxu0 0.0
  %184 = vmatprep.subr.mxu0 0.0
  %185 = vmatpush1.msra.mxu0 0.0
  %186 = vmatprep.subr.mxu0 0.0
  %187 = vmatpush1.msra.mxu0 0.0
  %188 = vmatprep.subr.mxu0 0.0
  %189 = vmatpush1.msra.mxu0 0.0
  %190 = vmatprep.subr.mxu0 0.0
  %191 = vmatpush1.msra.mxu0 0.0
  %192 = vmatprep.subr.mxu0 0.0
  %193 = vmatpush1.msra.mxu0 0.0
  %194 = vmatprep.subr.mxu0 0.0
  %195 = vmatpush1.msra.mxu0 0.0
  %196 = vmatprep.subr.mxu0 0.0
  %197 = vmatpush1.msra.mxu0 0.0
  %198 = vmatprep.subr.mxu0 0.0
  %199 = vmatpush1.msra.mxu0 0.0
  %200 = vmatprep.subr.mxu0 0.0
  %201 = vmatpush1.msra.mxu0 0.0
  %202 = vmatprep.subr.mxu0 0.0
  %203 = vmatpush1.msra.mxu0 0.0
  %204 = vmatprep.subr.mxu0 0.0
  %205 = vmatpush1.msra.mxu0 0.0
  %206 = vmatprep.subr.mxu0 0.0
  %207 = vmatpush1.msra.mxu0 0.0
  %208 = vmatprep.subr.mxu0 0.0
  %209 = vmatpush1.msra.mxu0 0.0
  %210 = vmatprep.subr.mxu0 0.0
  %211 = vmatpush1.msra.mxu0 0.0
  %212 = vmatprep.subr.mxu0 0.0
  %213 = vmatpush1.msra.mxu0 0.0
  %214 = vmatprep.subr.mxu0 0.0
  %215 = vmatpush1.msra.mxu0 0.0
  %216 = vmatprep.subr.mxu0 0.0
  %217 = vmatpush1.msra.mxu0 0.0
  %218 = vmatprep.subr.mxu0 0.0
  %219 = vmatpush1.msra.mxu0 0.0
  %220 = vmatprep.subr.mxu0 0.0
  %221 = vmatpush1.msra.mxu0 0.0
  %222 = vmatprep.subr.mxu0 0.0
  %223 = vmatpush1.msra.mxu0 0.0
  %224 = vmatprep.subr.mxu0 0.0
  %225 = vmatpush1.msra.mxu0 0.0
  %226 = vmatprep.subr.mxu0 0.0
  %227 = vmatpush1.msra.mxu0 0.0
  %228 = vmatprep.subr.mxu0 0.0
  %229 = vmatpush1.msra.mxu0 0.0
  %230 = vmatprep.mubr.f32.mxu0 0.0
  %231 = vmatmul.mubr.f32.gmra.mrb[0].mxu0 %v164
  %v232 = vpop.f32.mrb[0].mxu0
  %v233 = vadd.f32 %v160, %v232
  %v234 = vpop.f32.mrb[0].mxu0
  %235 = vdwg.mxu0
  %236 = vst [vmem:[%s5] sm:$0x3] %v233
  // Predicated region
  $region22: #{mlp_forward.1} parent=0 // pred_check
    _
  $region23: #{mlp_forward.1} parent=0 // pred_check_branch
    %238 = sbr.rel (0) target = $region25
  $region24: #{mlp_forward.1} parent=0 // pred_region
    _
  $region25: #{mlp_forward.1} parent=0 // pred_fallthru
    _
  // Predicated region
  $region26: #{mlp_forward.1} parent=0 // pred_check
    _
  $region27: #{mlp_forward.1} parent=0 // pred_check_branch
    %240 = sbr.rel (0) target = $region29
  $region28: #{mlp_forward.1} parent=0 // pred_region
    _
  $region29: #{mlp_forward.1} parent=0 // pred_fallthru
    _

</llo_original>
